<compile_context>
chip_gen: v5e
topology: v5e:2x2
jax: 0.10.0
libtpu: 0.0.40
codegen_flags: <defaults>
</compile_context>

<pallas_src>
import functools

import jax
import jax.numpy as jnp
from jax import lax
from jax.experimental import pallas as pl
from jax.experimental.pallas import tpu as pltpu


def _round_up(x, m):
    return (x + m - 1) // m * m


def _grgc_kernel(sw_ref, dst_ref, x_ref, w_ref, b_ref, out_ref, acc_ref, *,
                 num_relation):
    i = pl.program_id(0)

    @pl.when(i == 0)
    def _init():
        acc_ref[...] = jnp.zeros_like(acc_ref)

    x = x_ref[...]                                       # (N_pad, D_pad) f32
    n_pad, d_pad = x.shape
    src = sw_ref[:, 0:1]                                 # (TE, 1) i32  source node
    ew = pltpu.bitcast(sw_ref[:, 1:2], jnp.float32)      # (TE, 1) f32  edge weight (0 pad)
    dst = dst_ref[...]                                   # (1, TE) i32  rel*N_pad+node (-1 pad)
    te = src.shape[0]

    # --- message = input[node_in] * edge_weight ------------------------------
    # gather one-hot (TE, N_pad), edge weight folded in:
    #   g[e, n] = edge_weight[e] if src[e] == n else 0
    n_iota_g = lax.broadcasted_iota(jnp.int32, (te, n_pad), 1)
    g = (src == n_iota_g).astype(jnp.float32) * ew                  # (TE, N_pad)
    msg = jnp.dot(g, x, preferred_element_type=jnp.float32)         # (TE, D_pad)
    # TODO(synk): edge_linear(graph.edge_feature) / edge_input add omitted
    # (edge_input_dim=None in this config).

    # --- scatter_add into the node-major update accumulator ------------------
    #   acc[n, r*D_pad + d] += sum_e [dst[e]==n and rel[e]==r] * msg[e, d]
    n_iota_s = lax.broadcasted_iota(jnp.int32, (n_pad, te), 0)
    for r in range(num_relation):
        s_r = (dst == n_iota_s + r * n_pad).astype(jnp.float32)     # (N_pad, TE)
        acc_ref[:, r * d_pad:(r + 1) * d_pad] += jnp.dot(
            s_r, msg, preferred_element_type=jnp.float32)           # (N_pad, D_pad)

    # --- combine: single linear over the (num_relation * input_dim) view + ReLU
    @pl.when(i == pl.num_programs(0) - 1)
    def _finalize():
        out = jnp.dot(acc_ref[...], w_ref[...],
                      preferred_element_type=jnp.float32)           # (N_pad, O_pad)
        # TODO(synk): batch_norm branch omitted (batch_norm=False here).
        out_ref[...] = jnp.maximum(out + b_ref[...], 0.0)           # relu


def geometric_relational_graph_conv(x, edge_list, edge_weight, weight, bias,
                                    num_relation, *, edge_tile=256):
    """x: (N, D) f32; edge_list: (E, 3) int [src, dst, rel]; edge_weight: (E,);
    weight: (O, num_relation*D); bias: (O,). Returns (N, O) f32."""
    N, D = x.shape
    E = edge_list.shape[0]
    O = weight.shape[0]
    R = num_relation

    n_pad = _round_up(N, 8)
    d_pad = _round_up(D, 128)       # lane-dense feature dim (review item)
    o_pad = _round_up(O, 128)
    e_pad = _round_up(max(E, 1), edge_tile)
    n_tiles = e_pad // edge_tile

    # edge fields. Padded edges have ew=0 (gather contributes nothing) and
    # dst=-1 (never matches the scatter iota).
    src = edge_list[:, 0].astype(jnp.int32)
    dst_enc = (edge_list[:, 2].astype(jnp.int32) * n_pad
               + edge_list[:, 1].astype(jnp.int32))
    ew_bits = lax.bitcast_convert_type(edge_weight.astype(jnp.float32),
                                       jnp.int32)
    edge_sw = (jnp.zeros((e_pad, 2), jnp.int32)
               .at[:E, 0].set(src)
               .at[:E, 1].set(ew_bits))                       # column-oriented
    dst_row = jnp.full((1, e_pad), -1, jnp.int32).at[0, :E].set(dst_enc)

    # node features, zero padded to (N_pad, D_pad) — no transpose needed.
    x_p = jnp.zeros((n_pad, d_pad), jnp.float32).at[:N, :D].set(
        x.astype(jnp.float32))

    # weight (O, R*D) -> (R*D_pad, O_pad) slab matching the node-major acc:
    #   w2[r*D_pad + d, o] = weight[o, r*D + d]
    w_rdo = weight.astype(jnp.float32).reshape(O, R, D).transpose(1, 2, 0)
    w2 = (jnp.zeros((R, d_pad, o_pad), jnp.float32)
          .at[:, :D, :O].set(w_rdo)
          .reshape(R * d_pad, o_pad))
    b2 = jnp.zeros((1, o_pad), jnp.float32).at[0, :O].set(
        bias.astype(jnp.float32))

    kernel = functools.partial(_grgc_kernel, num_relation=R)

    flops = 2 * e_pad * n_pad * d_pad * (1 + R) + 2 * n_pad * R * d_pad * o_pad
    bytes_accessed = 4 * (3 * e_pad + n_pad * d_pad + R * d_pad * o_pad
                          + o_pad + n_pad * o_pad)

    out = pl.pallas_call(
        kernel,
        out_shape=jax.ShapeDtypeStruct((n_pad, o_pad), jnp.float32),
        grid_spec=pltpu.PrefetchScalarGridSpec(
            num_scalar_prefetch=0,
            grid=(n_tiles,),
            in_specs=[
                pl.BlockSpec((edge_tile, 2), lambda i: (i, 0)),    # [src, ew-bits]
                pl.BlockSpec((1, edge_tile), lambda i: (0, i)),    # dst (encoded)
                pl.BlockSpec((n_pad, d_pad), lambda i: (0, 0)),    # x (resident)
                pl.BlockSpec((R * d_pad, o_pad), lambda i: (0, 0)),  # weight (resident)
                pl.BlockSpec((1, o_pad), lambda i: (0, 0)),        # bias (resident)
            ],
            out_specs=pl.BlockSpec((n_pad, o_pad), lambda i: (0, 0)),
            scratch_shapes=[pltpu.VMEM((n_pad, R * d_pad), jnp.float32)],
        ),
        compiler_params=pltpu.CompilerParams(
            dimension_semantics=("arbitrary",),   # edge axis is a reduction
            vmem_limit_bytes=32 * 1024 * 1024,
        ),
        cost_estimate=pl.CostEstimate(flops=flops, transcendentals=0,
                                      bytes_accessed=bytes_accessed),
    )(edge_sw, dst_row, x_p, w2, b2)

    return out[:N, :O]


def _reference(x, edge_list, edge_weight, weight, bias, num_relation):
    """Pure-JAX replica of the torch forward for verification."""
    N, D = x.shape
    node_in = edge_list[:, 0]
    msg = x[node_in]
    node_out = edge_list[:, 1] * num_relation + edge_list[:, 2]
    upd = jnp.zeros((N * num_relation, D), jnp.float32)
    upd = upd.at[node_out].add(msg * edge_weight[:, None])
    upd = upd.reshape(N, num_relation * D)
    out = upd @ weight.T + bias
    return jax.nn.relu(out)


if __name__ == "__main__":
    # small, module-consistent shapes
    N = 16    # num_node
    D = 32    # input_dim
    R = 4     # num_relation
    O = 32    # output_dim
    E = 300   # num_edge  (-> 2 edge tiles of 256 after padding)

    key = jax.random.PRNGKey(0)
    kx, ksrc, kdst, krel, kw, kwgt, kb = jax.random.split(key, 7)

    x = jax.random.normal(kx, (N, D), jnp.float32)
    edge_src = jax.random.randint(ksrc, (E,), 0, N, jnp.int32)
    edge_dst = jax.random.randint(kdst, (E,), 0, N, jnp.int32)
    edge_rel = jax.random.randint(krel, (E,), 0, R, jnp.int32)
    edge_list = jnp.stack([edge_src, edge_dst, edge_rel], axis=1)   # (E, 3)
    edge_weight = jax.random.uniform(kw, (E,), jnp.float32, 0.1, 1.0)

    # deterministic nn.Linear(R*D, O)-style init
    bound = 1.0 / (R * D) ** 0.5
    weight = jax.random.uniform(kwgt, (O, R * D), jnp.float32, -bound, bound)
    bias = jax.random.uniform(kb, (O,), jnp.float32, -bound, bound)

    out = geometric_relational_graph_conv(x, edge_list, edge_weight,
                                          weight, bias, R)
    out = jax.block_until_ready(out)

    ref = _reference(x, edge_list, edge_weight, weight, bias, R)
    assert out.shape == (N, O)
    assert jnp.allclose(out, ref, rtol=1e-5, atol=1e-5), \
        f"max abs diff {jnp.max(jnp.abs(out - ref))}"

    print("KERNEL_OK")
</pallas_src>

<mosaic_0001>
module attributes {stable_mosaic.version = 11 : i64} {
  func.func @_grgc_kernel(%arg0: i32, %arg1: memref<256x2xi32, #tpu.memory_space<vmem>>, %arg2: memref<1x256xi32, #tpu.memory_space<vmem>>, %arg3: memref<16x128xf32, #tpu.memory_space<vmem>>, %arg4: memref<512x128xf32, #tpu.memory_space<vmem>>, %arg5: memref<1x128xf32, #tpu.memory_space<vmem>>, %arg6: memref<16x128xf32, #tpu.memory_space<vmem>>, %arg7: memref<16x512xf32, #tpu.memory_space<vmem>>) attributes {dimension_semantics = [#tpu.dimension_semantics<arbitrary>], iteration_bounds = array<i64: 2>, scalar_prefetch = 0 : i64, scratch_operands = 1 : i64, tpu.core_type = #tpu.core_type<tc>, window_params = [{transform_indices = @transform_0, window_bounds = array<i64: 256, 2>}, {transform_indices = @transform_1, window_bounds = array<i64: 1, 256>}, {pipeline_mode = #tpu.pipeline_mode<synchronous>, transform_indices = @transform_2, window_bounds = array<i64: 16, 128>}, {pipeline_mode = #tpu.pipeline_mode<synchronous>, transform_indices = @transform_3, window_bounds = array<i64: 512, 128>}, {pipeline_mode = #tpu.pipeline_mode<synchronous>, transform_indices = @transform_4, window_bounds = array<i64: 1, 128>}, {pipeline_mode = #tpu.pipeline_mode<synchronous>, transform_indices = @transform_5, window_bounds = array<i64: 16, 128>}]} {
    %c0_i32 = arith.constant 0 : i32
    %0 = arith.cmpi eq, %arg0, %c0_i32 : i32
    %1 = arith.extui %0 : i1 to i32
    %c0_i32_0 = arith.constant 0 : i32
    %2 = arith.cmpi ne, %1, %c0_i32_0 : i32
    scf.if %2 {
      %cst_26 = arith.constant 0.000000e+00 : f32
      %60 = vector.broadcast %cst_26 : f32 to vector<16x512xf32>
      %c0_27 = arith.constant 0 : index
      %c0_28 = arith.constant 0 : index
      %61 = vector.load %arg7[%c0_27, %c0_28] : memref<16x512xf32, #tpu.memory_space<vmem>>, vector<16x512xf32>
      tpu.vector_store %arg7[%c0_27, %c0_28], %60 {strides = array<i32>} : memref<16x512xf32, #tpu.memory_space<vmem>>, vector<16x512xf32>,
    } else {
    }
    %c0 = arith.constant 0 : index
    %c0_1 = arith.constant 0 : index
    %3 = vector.load %arg3[%c0, %c0_1] : memref<16x128xf32, #tpu.memory_space<vmem>>, vector<16x128xf32>
    %c0_2 = arith.constant 0 : index
    %c0_3 = arith.constant 0 : index
    %4 = vector.load %arg1[%c0_2, %c0_3] : memref<256x2xi32, #tpu.memory_space<vmem>>, vector<256x1xi32>
    %c0_4 = arith.constant 0 : index
    %c1 = arith.constant 1 : index
    %5 = vector.load %arg1[%c0_4, %c1] : memref<256x2xi32, #tpu.memory_space<vmem>>, vector<256x1xi32>
    %6 = tpu.bitcast %5 : vector<256x1xi32> -> vector<256x1xf32>
    %c0_5 = arith.constant 0 : index
    %c0_6 = arith.constant 0 : index
    %7 = vector.load %arg2[%c0_5, %c0_6] : memref<1x256xi32, #tpu.memory_space<vmem>>, vector<1x256xi32>
    %8 = tpu.iota {dimensions = array<i32: 1>} : vector<256x16xi32>
    %9 = vector.broadcast %4 : vector<256x1xi32> to vector<256x16xi32>
    %10 = arith.cmpi eq, %9, %8 : vector<256x16xi32>
    %11 = arith.extui %10 : vector<256x16xi1> to vector<256x16xi32>
    %12 = arith.sitofp %11 : vector<256x16xi32> to vector<256x16xf32>
    %13 = vector.broadcast %6 : vector<256x1xf32> to vector<256x16xf32>
    %14 = arith.mulf %12, %13 : vector<256x16xf32>
    %cst = arith.constant dense<0.000000e+00> : vector<256x128xf32>
    %15 = tpu.matmul %14, %3, %cst {dimension_numbers = #tpu.dot_dimension_numbers<[1], [0], [0], [1], [0, 0, 1, 1], [], []>} : vector<256x16xf32>, vector<16x128xf32>, vector<256x128xf32> -> vector<256x128xf32>
    %16 = tpu.iota {dimensions = array<i32: 0>} : vector<16x256xi32>
    %c0_i32_7 = arith.constant 0 : i32
    %17 = vector.broadcast %c0_i32_7 : i32 to vector<16x256xi32>
    %18 = arith.addi %16, %17 : vector<16x256xi32>
    %19 = vector.broadcast %7 : vector<1x256xi32> to vector<16x256xi32>
    %20 = arith.cmpi eq, %19, %18 : vector<16x256xi32>
    %21 = arith.extui %20 : vector<16x256xi1> to vector<16x256xi32>
    %22 = arith.sitofp %21 : vector<16x256xi32> to vector<16x256xf32>
    %c0_8 = arith.constant 0 : index
    %c0_9 = arith.constant 0 : index
    %23 = vector.load %arg7[%c0_8, %c0_9] : memref<16x512xf32, #tpu.memory_space<vmem>>, vector<16x128xf32>
    %cst_10 = arith.constant dense<0.000000e+00> : vector<16x128xf32>
    %24 = tpu.matmul %22, %15, %cst_10 {dimension_numbers = #tpu.dot_dimension_numbers<[1], [0], [0], [1], [0, 0, 1, 1], [], []>} : vector<16x256xf32>, vector<256x128xf32>, vector<16x128xf32> -> vector<16x128xf32>
    %25 = arith.addf %23, %24 : vector<16x128xf32>
    %c0_11 = arith.constant 0 : index
    %c0_12 = arith.constant 0 : index
    %26 = vector.load %arg7[%c0_11, %c0_12] : memref<16x512xf32, #tpu.memory_space<vmem>>, vector<16x128xf32>
    tpu.vector_store %arg7[%c0_11, %c0_12], %25 {strides = array<i32>} : memref<16x512xf32, #tpu.memory_space<vmem>>, vector<16x128xf32>,
    %c16_i32 = arith.constant 16 : i32
    %27 = vector.broadcast %c16_i32 : i32 to vector<16x256xi32>
    %28 = arith.addi %16, %27 : vector<16x256xi32>
    %29 = vector.broadcast %7 : vector<1x256xi32> to vector<16x256xi32>
    %30 = arith.cmpi eq, %29, %28 : vector<16x256xi32>
    %31 = arith.extui %30 : vector<16x256xi1> to vector<16x256xi32>
    %32 = arith.sitofp %31 : vector<16x256xi32> to vector<16x256xf32>
    %c0_13 = arith.constant 0 : index
    %c128 = arith.constant 128 : index
    %33 = vector.load %arg7[%c0_13, %c128] : memref<16x512xf32, #tpu.memory_space<vmem>>, vector<16x128xf32>
    %cst_14 = arith.constant dense<0.000000e+00> : vector<16x128xf32>
    %34 = tpu.matmul %32, %15, %cst_14 {dimension_numbers = #tpu.dot_dimension_numbers<[1], [0], [0], [1], [0, 0, 1, 1], [], []>} : vector<16x256xf32>, vector<256x128xf32>, vector<16x128xf32> -> vector<16x128xf32>
    %35 = arith.addf %33, %34 : vector<16x128xf32>
    %c0_15 = arith.constant 0 : index
    %c128_16 = arith.constant 128 : index
    %36 = vector.load %arg7[%c0_15, %c128_16] : memref<16x512xf32, #tpu.memory_space<vmem>>, vector<16x128xf32>
    tpu.vector_store %arg7[%c0_15, %c128_16], %35 {strides = array<i32>} : memref<16x512xf32, #tpu.memory_space<vmem>>, vector<16x128xf32>,
    %c32_i32 = arith.constant 32 : i32
    %37 = vector.broadcast %c32_i32 : i32 to vector<16x256xi32>
    %38 = arith.addi %16, %37 : vector<16x256xi32>
    %39 = vector.broadcast %7 : vector<1x256xi32> to vector<16x256xi32>
    %40 = arith.cmpi eq, %39, %38 : vector<16x256xi32>
    %41 = arith.extui %40 : vector<16x256xi1> to vector<16x256xi32>
    %42 = arith.sitofp %41 : vector<16x256xi32> to vector<16x256xf32>
    %c0_17 = arith.constant 0 : index
    %c256 = arith.constant 256 : index
    %43 = vector.load %arg7[%c0_17, %c256] : memref<16x512xf32, #tpu.memory_space<vmem>>, vector<16x128xf32>
    %cst_18 = arith.constant dense<0.000000e+00> : vector<16x128xf32>
    %44 = tpu.matmul %42, %15, %cst_18 {dimension_numbers = #tpu.dot_dimension_numbers<[1], [0], [0], [1], [0, 0, 1, 1], [], []>} : vector<16x256xf32>, vector<256x128xf32>, vector<16x128xf32> -> vector<16x128xf32>
    %45 = arith.addf %43, %44 : vector<16x128xf32>
    %c0_19 = arith.constant 0 : index
    %c256_20 = arith.constant 256 : index
    %46 = vector.load %arg7[%c0_19, %c256_20] : memref<16x512xf32, #tpu.memory_space<vmem>>, vector<16x128xf32>
    tpu.vector_store %arg7[%c0_19, %c256_20], %45 {strides = array<i32>} : memref<16x512xf32, #tpu.memory_space<vmem>>, vector<16x128xf32>,
    %c48_i32 = arith.constant 48 : i32
    %47 = vector.broadcast %c48_i32 : i32 to vector<16x256xi32>
    %48 = arith.addi %16, %47 : vector<16x256xi32>
    %49 = vector.broadcast %7 : vector<1x256xi32> to vector<16x256xi32>
    %50 = arith.cmpi eq, %49, %48 : vector<16x256xi32>
    %51 = arith.extui %50 : vector<16x256xi1> to vector<16x256xi32>
    %52 = arith.sitofp %51 : vector<16x256xi32> to vector<16x256xf32>
    %c0_21 = arith.constant 0 : index
    %c384 = arith.constant 384 : index
    %53 = vector.load %arg7[%c0_21, %c384] : memref<16x512xf32, #tpu.memory_space<vmem>>, vector<16x128xf32>
    %cst_22 = arith.constant dense<0.000000e+00> : vector<16x128xf32>
    %54 = tpu.matmul %52, %15, %cst_22 {dimension_numbers = #tpu.dot_dimension_numbers<[1], [0], [0], [1], [0, 0, 1, 1], [], []>} : vector<16x256xf32>, vector<256x128xf32>, vector<16x128xf32> -> vector<16x128xf32>
    %55 = arith.addf %53, %54 : vector<16x128xf32>
    %c0_23 = arith.constant 0 : index
    %c384_24 = arith.constant 384 : index
    %56 = vector.load %arg7[%c0_23, %c384_24] : memref<16x512xf32, #tpu.memory_space<vmem>>, vector<16x128xf32>
    tpu.vector_store %arg7[%c0_23, %c384_24], %55 {strides = array<i32>} : memref<16x512xf32, #tpu.memory_space<vmem>>, vector<16x128xf32>,
    %c1_i32 = arith.constant 1 : i32
    %57 = arith.cmpi eq, %arg0, %c1_i32 : i32
    %58 = arith.extui %57 : i1 to i32
    %c0_i32_25 = arith.constant 0 : i32
    %59 = arith.cmpi ne, %58, %c0_i32_25 : i32
    scf.if %59 {
      %c0_26 = arith.constant 0 : index
      %c0_27 = arith.constant 0 : index
      %60 = vector.load %arg7[%c0_26, %c0_27] : memref<16x512xf32, #tpu.memory_space<vmem>>, vector<16x512xf32>
      %c0_28 = arith.constant 0 : index
      %c0_29 = arith.constant 0 : index
      %61 = vector.load %arg4[%c0_28, %c0_29] : memref<512x128xf32, #tpu.memory_space<vmem>>, vector<512x128xf32>
      %cst_30 = arith.constant dense<0.000000e+00> : vector<16x128xf32>
      %62 = tpu.matmul %60, %61, %cst_30 {dimension_numbers = #tpu.dot_dimension_numbers<[1], [0], [0], [1], [0, 0, 1, 1], [], []>} : vector<16x512xf32>, vector<512x128xf32>, vector<16x128xf32> -> vector<16x128xf32>
      %c0_31 = arith.constant 0 : index
      %c0_32 = arith.constant 0 : index
      %63 = vector.load %arg5[%c0_31, %c0_32] : memref<1x128xf32, #tpu.memory_space<vmem>>, vector<1x128xf32>
      %64 = vector.broadcast %63 : vector<1x128xf32> to vector<16x128xf32>
      %65 = arith.addf %62, %64 : vector<16x128xf32>
      %cst_33 = arith.constant 0.000000e+00 : f32
      %66 = vector.broadcast %cst_33 : f32 to vector<16x128xf32>
      %67 = arith.maximumf %65, %66 : vector<16x128xf32>
      %c0_34 = arith.constant 0 : index
      %c0_35 = arith.constant 0 : index
      %68 = vector.load %arg6[%c0_34, %c0_35] : memref<16x128xf32, #tpu.memory_space<vmem>>, vector<16x128xf32>
      tpu.vector_store %arg6[%c0_34, %c0_35], %67 {strides = array<i32>} : memref<16x128xf32, #tpu.memory_space<vmem>>, vector<16x128xf32>,
    } else {
    }
    return
  }
  func.func @transform_0(%arg0: i32) -> (i32, i32) {
    %c0_i32 = arith.constant 0 : i32
    %c0_i32_0 = arith.constant 0 : i32
    return %arg0, %c0_i32 : i32, i32
  }
  func.func @transform_1(%arg0: i32) -> (i32, i32) {
    %c0_i32 = arith.constant 0 : i32
    %c0_i32_0 = arith.constant 0 : i32
    return %c0_i32, %arg0 : i32, i32
  }
  func.func @transform_2(%arg0: i32) -> (i32, i32) {
    %c0_i32 = arith.constant 0 : i32
    %c0_i32_0 = arith.constant 0 : i32
    %c0_i32_1 = arith.constant 0 : i32
    return %c0_i32, %c0_i32_0 : i32, i32
  }
  func.func @transform_3(%arg0: i32) -> (i32, i32) {
    %c0_i32 = arith.constant 0 : i32
    %c0_i32_0 = arith.constant 0 : i32
    %c0_i32_1 = arith.constant 0 : i32
    return %c0_i32, %c0_i32_0 : i32, i32
  }
  func.func @transform_4(%arg0: i32) -> (i32, i32) {
    %c0_i32 = arith.constant 0 : i32
    %c0_i32_0 = arith.constant 0 : i32
    %c0_i32_1 = arith.constant 0 : i32
    return %c0_i32, %c0_i32_0 : i32, i32
  }
  func.func @transform_5(%arg0: i32) -> (i32, i32) {
    %c0_i32 = arith.constant 0 : i32
    %c0_i32_0 = arith.constant 0 : i32
    %c0_i32_1 = arith.constant 0 : i32
    return %c0_i32, %c0_i32_0 : i32, i32
  }
}

</mosaic_0001>

<llo_original>
// kernel: tpu_custom_call.1
$region0: #{tpu_custom_call.1}
  #allocation0 [shape = 'u32[]', space=smem, size = 0x4, offset = 0x4, fixed_abs, tag = 'smem constant byte address 0x4 - core index']
  #allocation1 [shape = 'u32[72,128]{1,0:T(1,128)}', space=vmem, size = 0x9000, scoped, tag = 'internal scratch']
  #allocation2 [shape = 'f32[16,512]{1,0:T(8,128)}', space=vmem, size = 0x8000, scoped, tag = 'scratch operand']
  %s0 = inlined_call_operand.vmem [shape: s32[512,2], index: 0, kind: input, shape index: {}]
  %s1 = inlined_call_operand.vmem [shape: s32[1,512], index: 1, kind: input, shape index: {}]
  %s2 = inlined_call_operand.hbm [shape: f32[16,128], index: 2, kind: input, shape index: {}]
  %s3 = inlined_call_operand.vmem [shape: f32[512,128], index: 3, kind: input, shape index: {}]
  %s4 = inlined_call_operand.vmem [shape: f32[1,128], index: 4, kind: input, shape index: {}]
  %s5 = inlined_call_operand.hbm [shape: f32[16,128], index: 5, kind: output, shape index: {}]
  %s6 = sld [smem:[#allocation0]]
  $region65: #{tpu_custom_call.1} parent=0
    _
  %s8 = ssub.s32 1, %s6
  %s9 = scalar_select 0, %s8, %s6
  $region1: #{tpu_custom_call.1} parent=0
    #allocation3 [shape = 'u8[8192]{0}', space=vmem, size = 0x2000, scoped, tag = 'input window, operand 2, single buffered']
    #allocation4 [shape = 's32[2]{0}', space=sflag, size = 0x8, scoped, tag = 'scoped memory for tpu_custom_call.1']
    #allocation5 [shape = 's32[2]{0}', space=sflag, size = 0x8, scoped, tag = 'scoped memory for tpu_custom_call.1']
    #allocation6 [shape = 'u8[8192]{0}', space=vmem, size = 0x2000, scoped, tag = 'output window, operand 0, single buffered']
    %10 = vsyncpa [#allocation4], 0
    %11 = vsyncpa [#allocation5], 0
    loop: start=0, step=1, limit=4
    $region2: #{tpu_custom_call.1} parent=1 // loop_pre_header
      _
    $region3: #{tpu_custom_call.1} parent=1 // loop_header
      %s13 = sphi 0, %s17
      %p14 = scmp.ge.s32.totalorder %s13, 4
      %s23 = sphi 0, %s25
      %s26 = sphi 0, %s23
      %s27 = sphi 0, %s26
      %s43 = sphi 0, %s27
      %s49 = sphi 0, %s51
      %s52 = sphi 0, %s49
      %s53 = sphi 0, %s52
      %s69 = sphi 0, %s53
      %s73 = sphi 0, %s73
      %s75 = sphi 0, %s73
      %s76 = sphi 0, %s75
      %s90 = sphi 0, %s76
      %s94 = sphi 0, %s94
      %s96 = sphi 0, %s94
      %s97 = sphi 0, %s96
      %s111 = sphi 0, %s97
      %s115 = sphi 0, %s115
      %s117 = sphi 0, %s115
      %s118 = sphi 0, %s117
      %s132 = sphi 0, %s118
      %s136 = sphi 0, %s136
      %s138 = sphi 0, %s136
      %s139 = sphi 0, %s138
      %s153 = sphi 0, %s139
    $region4: #{tpu_custom_call.1} parent=1 // loop_header_branch
      %16 = sbr.rel (%p14) target = $region8
    $region5: #{tpu_custom_call.1} parent=1 // loop_body
      %s18 = ssub.s32 %s13, 1
      %s19 = ssub.s32 %s13, 2
      %s20 = sadd.s32 %s13, 1
      %s21 = ssub.s32 %s13, %s20
      %p22 = scmp.eq.s32.totalorder %s21, 0
      %s24 = sadd.s32 %s23, 1
      %s25 = scalar_select %p22, %s23, %s24
      %p28 = pneg %p22
      %p29 = scmp.eq.s32.totalorder %s13, 1
      %p30 = por %p28, %p29
      %p31 = scmp.ne.s32.totalorder %s23, %s26
      %p32 = scmp.eq.s32.totalorder %s13, 0
      %p33 = por %p31, %p32
      %p34 = scmp.ne.s32.totalorder %s23, %s26
      %p35 = scmp.eq.s32.totalorder %s18, 1
      %p36 = por %p34, %p35
      %p37 = scmp.ne.s32.totalorder %s26, %s27
      %p38 = scmp.eq.s32.totalorder %s18, 0
      %p39 = por %p37, %p38
      %p40 = scmp.ne.s32.totalorder %s26, %s27
      %p41 = scmp.eq.s32.totalorder %s19, 1
      %p42 = por %p40, %p41
      %p44 = scmp.ne.s32.totalorder %s27, %s43
      %p45 = scmp.eq.s32.totalorder %s19, 0
      %p46 = por %p44, %p45
      %s47 = ssub.s32 %s13, %s20
      %p48 = scmp.eq.s32.totalorder %s47, 0
      %s50 = sadd.s32 %s49, 1
      %s51 = scalar_select %p48, %s49, %s50
      %p54 = pneg %p48
      %p55 = scmp.eq.s32.totalorder %s13, 1
      %p56 = por %p54, %p55
      %p57 = scmp.ne.s32.totalorder %s49, %s52
      %p58 = scmp.eq.s32.totalorder %s13, 0
      %p59 = por %p57, %p58
      %p60 = scmp.ne.s32.totalorder %s49, %s52
      %p61 = scmp.eq.s32.totalorder %s18, 1
      %p62 = por %p60, %p61
      %p63 = scmp.ne.s32.totalorder %s52, %s53
      %p64 = scmp.eq.s32.totalorder %s18, 0
      %p65 = por %p63, %p64
      %p66 = scmp.ne.s32.totalorder %s52, %s53
      %p67 = scmp.eq.s32.totalorder %s19, 1
      %p68 = por %p66, %p67
      %p70 = scmp.ne.s32.totalorder %s53, %s69
      %p71 = scmp.eq.s32.totalorder %s19, 0
      %p72 = por %p70, %p71
      %s74 = sadd.s32 %s73, 1
      %p77 = scmp.eq.s32.totalorder %s13, 1
      %p78 = scmp.ne.s32.totalorder %s73, %s75
      %p79 = scmp.eq.s32.totalorder %s13, 0
      %p80 = por %p78, %p79
      %p81 = scmp.ne.s32.totalorder %s73, %s75
      %p82 = scmp.eq.s32.totalorder %s18, 1
      %p83 = por %p81, %p82
      %p84 = scmp.ne.s32.totalorder %s75, %s76
      %p85 = scmp.eq.s32.totalorder %s18, 0
      %p86 = por %p84, %p85
      %p87 = scmp.ne.s32.totalorder %s75, %s76
      %p88 = scmp.eq.s32.totalorder %s19, 1
      %p89 = por %p87, %p88
      %p91 = scmp.ne.s32.totalorder %s76, %s90
      %p92 = scmp.eq.s32.totalorder %s19, 0
      %p93 = por %p91, %p92
      %s95 = sadd.s32 %s94, 1
      %p98 = scmp.eq.s32.totalorder %s13, 1
      %p99 = scmp.ne.s32.totalorder %s94, %s96
      %p100 = scmp.eq.s32.totalorder %s13, 0
      %p101 = por %p99, %p100
      %p102 = scmp.ne.s32.totalorder %s94, %s96
      %p103 = scmp.eq.s32.totalorder %s18, 1
      %p104 = por %p102, %p103
      %p105 = scmp.ne.s32.totalorder %s96, %s97
      %p106 = scmp.eq.s32.totalorder %s18, 0
      %p107 = por %p105, %p106
      %p108 = scmp.ne.s32.totalorder %s96, %s97
      %p109 = scmp.eq.s32.totalorder %s19, 1
      %p110 = por %p108, %p109
      %p112 = scmp.ne.s32.totalorder %s97, %s111
      %p113 = scmp.eq.s32.totalorder %s19, 0
      %p114 = por %p112, %p113
      %s116 = sadd.s32 %s115, 1
      %p119 = scmp.eq.s32.totalorder %s13, 1
      %p120 = scmp.ne.s32.totalorder %s115, %s117
      %p121 = scmp.eq.s32.totalorder %s13, 0
      %p122 = por %p120, %p121
      %p123 = scmp.ne.s32.totalorder %s115, %s117
      %p124 = scmp.eq.s32.totalorder %s18, 1
      %p125 = por %p123, %p124
      %p126 = scmp.ne.s32.totalorder %s117, %s118
      %p127 = scmp.eq.s32.totalorder %s18, 0
      %p128 = por %p126, %p127
      %p129 = scmp.ne.s32.totalorder %s117, %s118
      %p130 = scmp.eq.s32.totalorder %s19, 1
      %p131 = por %p129, %p130
      %p133 = scmp.ne.s32.totalorder %s118, %s132
      %p134 = scmp.eq.s32.totalorder %s19, 0
      %p135 = por %p133, %p134
      %s137 = sadd.s32 %s136, 1
      %p140 = scmp.eq.s32.totalorder %s13, 1
      %p141 = scmp.ne.s32.totalorder %s136, %s138
      %p142 = scmp.eq.s32.totalorder %s13, 0
      %p143 = por %p141, %p142
      %p144 = scmp.ne.s32.totalorder %s136, %s138
      %p145 = scmp.eq.s32.totalorder %s18, 1
      %p146 = por %p144, %p145
      %p147 = scmp.ne.s32.totalorder %s138, %s139
      %p148 = scmp.eq.s32.totalorder %s18, 0
      %p149 = por %p147, %p148
      %p150 = scmp.ne.s32.totalorder %s138, %s139
      %p151 = scmp.eq.s32.totalorder %s19, 1
      %p152 = por %p150, %p151
      %p154 = scmp.ne.s32.totalorder %s139, %s153
      %p155 = scmp.eq.s32.totalorder %s19, 0
      %p156 = por %p154, %p155
      %p157 = scmp.le.s32.totalorder 1, %s13
      %p158 = scmp.lt.s32.totalorder %s13, 3
      %p159 = pnand %p157, %p158
      %p160 = pneg %p159
      // Predicated region
      $region9: #{tpu_custom_call.1} parent=5 // pred_check
        _
      $region10: #{tpu_custom_call.1} parent=5 // pred_check_branch
        %162 = sbr.rel (%p159) target = $region12
      $region11: #{tpu_custom_call.1} parent=5 // pred_region
        %s163 = ssub.s32 %s13, 1
        // Predicated region
        $region13: #{tpu_custom_call.1} parent=11 // pred_check
          %p164 = pneg %p86
        $region14: #{tpu_custom_call.1} parent=11 // pred_check_branch
          %166 = sbr.rel (%p164) target = $region16
        $region15: #{tpu_custom_call.1} parent=11 // pred_region
          %168 = vsyncadd [#allocation4], 0
          %s169 = sshll.u32 %s2, 4
          %s170 = int_to_ptr.hbm [resolvable:$true] %s169
          %s171 = sshll.u32 [#allocation3], 4
          %s172 = int_to_ptr.vmem [resolvable:$true] %s171
          %177 = dma.hbm_to_vmem [thread:$0]  %s170, 256, %s172, [#allocation4], 128, 128, 8
        $region16: #{tpu_custom_call.1} parent=11 // pred_fallthru
          _
        // Predicated region
        $region17: #{tpu_custom_call.1} parent=11 // pred_check
          %p178 = pneg %p107
        $region18: #{tpu_custom_call.1} parent=11 // pred_check_branch
          %180 = sbr.rel (%p178) target = $region20
        $region19: #{tpu_custom_call.1} parent=11 // pred_region
          _
        $region20: #{tpu_custom_call.1} parent=11 // pred_fallthru
          _
        // Predicated region
        $region21: #{tpu_custom_call.1} parent=11 // pred_check
          %p181 = pneg %p128
        $region22: #{tpu_custom_call.1} parent=11 // pred_check_branch
          %183 = sbr.rel (%p181) target = $region24
        $region23: #{tpu_custom_call.1} parent=11 // pred_region
          _
        $region24: #{tpu_custom_call.1} parent=11 // pred_fallthru
          _
      $region12: #{tpu_custom_call.1} parent=5 // pred_fallthru
        _
      %p184 = scmp.lt.s32.totalorder %s13, 2
      // Predicated region
      $region25: #{tpu_custom_call.1} parent=5 // pred_check
        %p185 = pneg %p184
      $region26: #{tpu_custom_call.1} parent=5 // pred_check_branch
        %187 = sbr.rel (%p185) target = $region28
      $region27: #{tpu_custom_call.1} parent=5 // pred_region
        // Predicated region
        $region29: #{tpu_custom_call.1} parent=27 // pred_check
          %p188 = pneg %p33
        $region30: #{tpu_custom_call.1} parent=27 // pred_check_branch
          %190 = sbr.rel (%p188) target = $region32
        $region31: #{tpu_custom_call.1} parent=27 // pred_region
          %s191 = smul.u32 32, %s13
          %p192 = scmp.lt.s32.totalorder %s191, 63
          %s193 = scalar_select %p192, %s191, 63
          %s194 = smul.addr %s193, 8
          %s195 = scalar_lea.vmem %s0, %s194
          %s196 = smul.u32 32, %s13
        $region32: #{tpu_custom_call.1} parent=27 // pred_fallthru
          _
        // Predicated region
        $region33: #{tpu_custom_call.1} parent=27 // pred_check
          %p197 = pneg %p59
        $region34: #{tpu_custom_call.1} parent=27 // pred_check_branch
          %199 = sbr.rel (%p197) target = $region36
        $region35: #{tpu_custom_call.1} parent=27 // pred_region
          %s200 = smul.u32 2, %s13
          %p201 = scmp.lt.s32.totalorder %s200, 3
          %s202 = scalar_select %p201, %s200, 3
          %s203 = scalar_lea.vmem %s1, %s202
          %s204 = smul.u32 2, %s13
        $region36: #{tpu_custom_call.1} parent=27 // pred_fallthru
          _
      $region28: #{tpu_custom_call.1} parent=5 // pred_fallthru
        _
      %p205 = scmp.le.s32.totalorder 1, %s13
      %p206 = scmp.lt.s32.totalorder %s13, 3
      %p207 = pnand %p205, %p206
      %p208 = pneg %p207
      // Predicated region
      $region37: #{tpu_custom_call.1} parent=5 // pred_check
        _
      $region38: #{tpu_custom_call.1} parent=5 // pred_check_branch
        %210 = sbr.rel (%p207) target = $region40
      $region39: #{tpu_custom_call.1} parent=5 // pred_region
        %s211 = ssub.s32 %s13, 1
        // Predicated region
        $region41: #{tpu_custom_call.1} parent=39 // pred_check
          %p212 = pneg %p86
        $region42: #{tpu_custom_call.1} parent=39 // pred_check_branch
          %214 = sbr.rel (%p212) target = $region44
        $region43: #{tpu_custom_call.1} parent=39 // pred_region
          %216 = dma.done [#allocation4], 256
        $region44: #{tpu_custom_call.1} parent=39 // pred_fallthru
          _
        %s217 = smul.u32 32, %s18
        %p218 = scmp.lt.s32.totalorder %s217, 63
        %s219 = scalar_select %p218, %s217, 63
        %s220 = smul.addr %s219, 8
        %s221 = scalar_lea.vmem %s0, %s220
        %p222 = pneg %p39
        %p223 = pneg %p36
        %s224 = smul.u32 2, %s18
        %p225 = scmp.lt.s32.totalorder %s224, 3
        %s226 = scalar_select %p225, %s224, 3
        %s227 = scalar_lea.vmem %s1, %s226
        %p228 = pneg %p65
        %p229 = pneg %p62
        %p230 = pneg %p86
        %p231 = pneg %p83
        %p232 = pneg %p107
        %p233 = pneg %p104
        %p234 = pneg %p128
        %p235 = pneg %p125
        %p236 = pneg %p149
        %p237 = pneg %p146
        %s238 = smul.u32 32, %s18
        %p239 = scmp.lt.s32.totalorder %s238, 63
        %s240 = scalar_select %p239, %s238, 63
        %s241 = smul.addr %s240, 8
        %s242 = scalar_lea.vmem %s0, %s241
        %s243 = smul.u32 32, %s18
        %s244 = smul.u32 2, %s18
        %p245 = scmp.lt.s32.totalorder %s244, 3
        %s246 = scalar_select %p245, %s244, 3
        %s247 = scalar_lea.vmem %s1, %s246
        %s248 = smul.u32 2, %s18
        %p249 = scmp.eq.s32.totalorder %s18, 0
        // Predicated region
        $region45: #{tpu_custom_call.1} parent=39 // pred_check
          %p250 = pneg %p249
        $region46: #{tpu_custom_call.1} parent=39 // pred_check_branch
          %252 = sbr.rel (%p250) target = $region48
        $region47: #{tpu_custom_call.1} parent=39 // pred_region
          %253 = vst [vmem:[#allocation2] sm:$0xff] 0.0
          %254 = vst [vmem:[#allocation2 + $0x8] sm:$0xff] 0.0
          %255 = vst [vmem:[#allocation2 + $0x10] sm:$0xff] 0.0
          %256 = vst [vmem:[#allocation2 + $0x18] sm:$0xff] 0.0
          %257 = vst [vmem:[#allocation2 + $0x20] sm:$0xff] 0.0
          %258 = vst [vmem:[#allocation2 + $0x28] sm:$0xff] 0.0
          %259 = vst [vmem:[#allocation2 + $0x30] sm:$0xff] 0.0
          %260 = vst [vmem:[#allocation2 + $0x38] sm:$0xff] 0.0
        $region48: #{tpu_custom_call.1} parent=39 // pred_fallthru
          _
        %v261 = vld [vmem:[#allocation3] sm:$0xff]
        %v262 = vld [vmem:[#allocation3 + $0x8] sm:$0xff]
        %v263 = vld [vmem:[%s242] sm:$0xff]
        %v264 = vld [vmem:[%s242 + $0x8] sm:$0xff]
        %v265 = vld [vmem:[%s242 + $0x10] sm:$0xff]
        %v266 = vld [vmem:[%s242 + $0x18] sm:$0xff]
        %v267 = vld [vmem:[%s242 + $0x20] sm:$0xff]
        %v268 = vld [vmem:[%s242 + $0x28] sm:$0xff]
        %v269 = vld [vmem:[%s242 + $0x30] sm:$0xff]
        %v270 = vld [vmem:[%s242 + $0x38] sm:$0xff]
        %v271 = vld [vmem:[%s242 + $0x40] sm:$0xff]
        %v272 = vld [vmem:[%s242 + $0x48] sm:$0xff]
        %v273 = vld [vmem:[%s242 + $0x50] sm:$0xff]
        %v274 = vld [vmem:[%s242 + $0x58] sm:$0xff]
        %v275 = vld [vmem:[%s242 + $0x60] sm:$0xff]
        %v276 = vld [vmem:[%s242 + $0x68] sm:$0xff]
        %v277 = vld [vmem:[%s242 + $0x70] sm:$0xff]
        %v278 = vld [vmem:[%s242 + $0x78] sm:$0xff]
        %v279 = vld [vmem:[%s242 + $0x80] sm:$0xff]
        %v280 = vld [vmem:[%s242 + $0x88] sm:$0xff]
        %v281 = vld [vmem:[%s242 + $0x90] sm:$0xff]
        %v282 = vld [vmem:[%s242 + $0x98] sm:$0xff]
        %v283 = vld [vmem:[%s242 + $0xa0] sm:$0xff]
        %v284 = vld [vmem:[%s242 + $0xa8] sm:$0xff]
        %v285 = vld [vmem:[%s242 + $0xb0] sm:$0xff]
        %v286 = vld [vmem:[%s242 + $0xb8] sm:$0xff]
        %v287 = vld [vmem:[%s242 + $0xc0] sm:$0xff]
        %v288 = vld [vmem:[%s242 + $0xc8] sm:$0xff]
        %v289 = vld [vmem:[%s242 + $0xd0] sm:$0xff]
        %v290 = vld [vmem:[%s242 + $0xd8] sm:$0xff]
        %v291 = vld [vmem:[%s242 + $0xe0] sm:$0xff]
        %v292 = vld [vmem:[%s242 + $0xe8] sm:$0xff]
        %v293 = vld [vmem:[%s242 + $0xf0] sm:$0xff]
        %v294 = vld [vmem:[%s242 + $0xf8] sm:$0xff]
        %v295 = vld [vmem:[%s247] sm:$0x3]
        %v296 = vlaneseq
        %v297 = vand.u32 %v296, 127
        %298 = vset.pattern.permute.xlu0 0
        %299 = vperm.xlu0 %298, %v263
        %v300 = vpop.permute.xlu0 %299
        %301 = vset.pattern.permute.xlu0 0
        %302 = vperm.xlu0 %301, %v264
        %v303 = vpop.permute.xlu0 %302
        %304 = vset.pattern.permute.xlu0 0
        %305 = vperm.xlu0 %304, %v265
        %v306 = vpop.permute.xlu0 %305
        %307 = vset.pattern.permute.xlu0 0
        %308 = vperm.xlu0 %307, %v266
        %v309 = vpop.permute.xlu0 %308
        %310 = vset.pattern.permute.xlu0 0
        %311 = vperm.xlu0 %310, %v267
        %v312 = vpop.permute.xlu0 %311
        %313 = vset.pattern.permute.xlu0 0
        %314 = vperm.xlu0 %313, %v268
        %v315 = vpop.permute.xlu0 %314
        %316 = vset.pattern.permute.xlu0 0
        %317 = vperm.xlu0 %316, %v269
        %v318 = vpop.permute.xlu0 %317
        %319 = vset.pattern.permute.xlu0 0
        %320 = vperm.xlu0 %319, %v270
        %v321 = vpop.permute.xlu0 %320
        %322 = vset.pattern.permute.xlu0 0
        %323 = vperm.xlu0 %322, %v271
        %v324 = vpop.permute.xlu0 %323
        %325 = vset.pattern.permute.xlu0 0
        %326 = vperm.xlu0 %325, %v272
        %v327 = vpop.permute.xlu0 %326
        %328 = vset.pattern.permute.xlu0 0
        %329 = vperm.xlu0 %328, %v273
        %v330 = vpop.permute.xlu0 %329
        %331 = vset.pattern.permute.xlu0 0
        %332 = vperm.xlu0 %331, %v274
        %v333 = vpop.permute.xlu0 %332
        %334 = vset.pattern.permute.xlu0 0
        %335 = vperm.xlu0 %334, %v275
        %v336 = vpop.permute.xlu0 %335
        %337 = vset.pattern.permute.xlu0 0
        %338 = vperm.xlu0 %337, %v276
        %v339 = vpop.permute.xlu0 %338
        %340 = vset.pattern.permute.xlu0 0
        %341 = vperm.xlu0 %340, %v277
        %v342 = vpop.permute.xlu0 %341
        %343 = vset.pattern.permute.xlu0 0
        %344 = vperm.xlu0 %343, %v278
        %v345 = vpop.permute.xlu0 %344
        %346 = vset.pattern.permute.xlu0 0
        %347 = vperm.xlu0 %346, %v279
        %v348 = vpop.permute.xlu0 %347
        %349 = vset.pattern.permute.xlu0 0
        %350 = vperm.xlu0 %349, %v280
        %v351 = vpop.permute.xlu0 %350
        %352 = vset.pattern.permute.xlu0 0
        %353 = vperm.xlu0 %352, %v281
        %v354 = vpop.permute.xlu0 %353
        %355 = vset.pattern.permute.xlu0 0
        %356 = vperm.xlu0 %355, %v282
        %v357 = vpop.permute.xlu0 %356
        %358 = vset.pattern.permute.xlu0 0
        %359 = vperm.xlu0 %358, %v283
        %v360 = vpop.permute.xlu0 %359
        %361 = vset.pattern.permute.xlu0 0
        %362 = vperm.xlu0 %361, %v284
        %v363 = vpop.permute.xlu0 %362
        %364 = vset.pattern.permute.xlu0 0
        %365 = vperm.xlu0 %364, %v285
        %v366 = vpop.permute.xlu0 %365
        %367 = vset.pattern.permute.xlu0 0
        %368 = vperm.xlu0 %367, %v286
        %v369 = vpop.permute.xlu0 %368
        %370 = vset.pattern.permute.xlu0 0
        %371 = vperm.xlu0 %370, %v287
        %v372 = vpop.permute.xlu0 %371
        %373 = vset.pattern.permute.xlu0 0
        %374 = vperm.xlu0 %373, %v288
        %v375 = vpop.permute.xlu0 %374
        %376 = vset.pattern.permute.xlu0 0
        %377 = vperm.xlu0 %376, %v289
        %v378 = vpop.permute.xlu0 %377
        %379 = vset.pattern.permute.xlu0 0
        %380 = vperm.xlu0 %379, %v290
        %v381 = vpop.permute.xlu0 %380
        %382 = vset.pattern.permute.xlu0 0
        %383 = vperm.xlu0 %382, %v291
        %v384 = vpop.permute.xlu0 %383
        %385 = vset.pattern.permute.xlu0 0
        %386 = vperm.xlu0 %385, %v292
        %v387 = vpop.permute.xlu0 %386
        %388 = vset.pattern.permute.xlu0 0
        %389 = vperm.xlu0 %388, %v293
        %v390 = vpop.permute.xlu0 %389
        %391 = vset.pattern.permute.xlu0 0
        %392 = vperm.xlu0 %391, %v294
        %v393 = vpop.permute.xlu0 %392
        %vm394 = vcmp.eq.s32.totalorder %v300, %v297
        %vm395 = vcmp.eq.s32.totalorder %v303, %v297
        %vm396 = vcmp.eq.s32.totalorder %v306, %v297
        %vm397 = vcmp.eq.s32.totalorder %v309, %v297
        %vm398 = vcmp.eq.s32.totalorder %v312, %v297
        %vm399 = vcmp.eq.s32.totalorder %v315, %v297
        %vm400 = vcmp.eq.s32.totalorder %v318, %v297
        %vm401 = vcmp.eq.s32.totalorder %v321, %v297
        %vm402 = vcmp.eq.s32.totalorder %v324, %v297
        %vm403 = vcmp.eq.s32.totalorder %v327, %v297
        %vm404 = vcmp.eq.s32.totalorder %v330, %v297
        %vm405 = vcmp.eq.s32.totalorder %v333, %v297
        %vm406 = vcmp.eq.s32.totalorder %v336, %v297
        %vm407 = vcmp.eq.s32.totalorder %v339, %v297
        %vm408 = vcmp.eq.s32.totalorder %v342, %v297
        %vm409 = vcmp.eq.s32.totalorder %v345, %v297
        %vm410 = vcmp.eq.s32.totalorder %v348, %v297
        %vm411 = vcmp.eq.s32.totalorder %v351, %v297
        %vm412 = vcmp.eq.s32.totalorder %v354, %v297
        %vm413 = vcmp.eq.s32.totalorder %v357, %v297
        %vm414 = vcmp.eq.s32.totalorder %v360, %v297
        %vm415 = vcmp.eq.s32.totalorder %v363, %v297
        %vm416 = vcmp.eq.s32.totalorder %v366, %v297
        %vm417 = vcmp.eq.s32.totalorder %v369, %v297
        %vm418 = vcmp.eq.s32.totalorder %v372, %v297
        %vm419 = vcmp.eq.s32.totalorder %v375, %v297
        %vm420 = vcmp.eq.s32.totalorder %v378, %v297
        %vm421 = vcmp.eq.s32.totalorder %v381, %v297
        %vm422 = vcmp.eq.s32.totalorder %v384, %v297
        %vm423 = vcmp.eq.s32.totalorder %v387, %v297
        %vm424 = vcmp.eq.s32.totalorder %v390, %v297
        %vm425 = vcmp.eq.s32.totalorder %v393, %v297
        %v426 = vsel %vm394, 1, 0
        %v427 = vsel %vm395, 1, 0
        %v428 = vsel %vm396, 1, 0
        %v429 = vsel %vm397, 1, 0
        %v430 = vsel %vm398, 1, 0
        %v431 = vsel %vm399, 1, 0
        %v432 = vsel %vm400, 1, 0
        %v433 = vsel %vm401, 1, 0
        %v434 = vsel %vm402, 1, 0
        %v435 = vsel %vm403, 1, 0
        %v436 = vsel %vm404, 1, 0
        %v437 = vsel %vm405, 1, 0
        %v438 = vsel %vm406, 1, 0
        %v439 = vsel %vm407, 1, 0
        %v440 = vsel %vm408, 1, 0
        %v441 = vsel %vm409, 1, 0
        %v442 = vsel %vm410, 1, 0
        %v443 = vsel %vm411, 1, 0
        %v444 = vsel %vm412, 1, 0
        %v445 = vsel %vm413, 1, 0
        %v446 = vsel %vm414, 1, 0
        %v447 = vsel %vm415, 1, 0
        %v448 = vsel %vm416, 1, 0
        %v449 = vsel %vm417, 1, 0
        %v450 = vsel %vm418, 1, 0
        %v451 = vsel %vm419, 1, 0
        %v452 = vsel %vm420, 1, 0
        %v453 = vsel %vm421, 1, 0
        %v454 = vsel %vm422, 1, 0
        %v455 = vsel %vm423, 1, 0
        %v456 = vsel %vm424, 1, 0
        %v457 = vsel %vm425, 1, 0
        %v458 = vcvt.s32.f32 %v426
        %v459 = vcvt.s32.f32 %v427
        %v460 = vcvt.s32.f32 %v428
        %v461 = vcvt.s32.f32 %v429
        %v462 = vcvt.s32.f32 %v430
        %v463 = vcvt.s32.f32 %v431
        %v464 = vcvt.s32.f32 %v432
        %v465 = vcvt.s32.f32 %v433
        %v466 = vcvt.s32.f32 %v434
        %v467 = vcvt.s32.f32 %v435
        %v468 = vcvt.s32.f32 %v436
        %v469 = vcvt.s32.f32 %v437
        %v470 = vcvt.s32.f32 %v438
        %v471 = vcvt.s32.f32 %v439
        %v472 = vcvt.s32.f32 %v440
        %v473 = vcvt.s32.f32 %v441
        %v474 = vcvt.s32.f32 %v442
        %v475 = vcvt.s32.f32 %v443
        %v476 = vcvt.s32.f32 %v444
        %v477 = vcvt.s32.f32 %v445
        %v478 = vcvt.s32.f32 %v446
        %v479 = vcvt.s32.f32 %v447
        %v480 = vcvt.s32.f32 %v448
        %v481 = vcvt.s32.f32 %v449
        %v482 = vcvt.s32.f32 %v450
        %v483 = vcvt.s32.f32 %v451
        %v484 = vcvt.s32.f32 %v452
        %v485 = vcvt.s32.f32 %v453
        %v486 = vcvt.s32.f32 %v454
        %v487 = vcvt.s32.f32 %v455
        %v488 = vcvt.s32.f32 %v456
        %v489 = vcvt.s32.f32 %v457
        %490 = vset.pattern.permute.xlu0 1
        %491 = vperm.xlu0 %490, %v263
        %v492 = vpop.permute.xlu0 %491
        %494 = vset.pattern.permute.xlu0 1
        %495 = vperm.xlu0 %494, %v264
        %v496 = vpop.permute.xlu0 %495
        %498 = vset.pattern.permute.xlu0 1
        %499 = vperm.xlu0 %498, %v265
        %v500 = vpop.permute.xlu0 %499
        %502 = vset.pattern.permute.xlu0 1
        %503 = vperm.xlu0 %502, %v266
        %v504 = vpop.permute.xlu0 %503
        %506 = vset.pattern.permute.xlu0 1
        %507 = vperm.xlu0 %506, %v267
        %v508 = vpop.permute.xlu0 %507
        %510 = vset.pattern.permute.xlu0 1
        %511 = vperm.xlu0 %510, %v268
        %v512 = vpop.permute.xlu0 %511
        %514 = vset.pattern.permute.xlu0 1
        %515 = vperm.xlu0 %514, %v269
        %v516 = vpop.permute.xlu0 %515
        %518 = vset.pattern.permute.xlu0 1
        %519 = vperm.xlu0 %518, %v270
        %v520 = vpop.permute.xlu0 %519
        %522 = vset.pattern.permute.xlu0 1
        %523 = vperm.xlu0 %522, %v271
        %v524 = vpop.permute.xlu0 %523
        %526 = vset.pattern.permute.xlu0 1
        %527 = vperm.xlu0 %526, %v272
        %v528 = vpop.permute.xlu0 %527
        %530 = vset.pattern.permute.xlu0 1
        %531 = vperm.xlu0 %530, %v273
        %v532 = vpop.permute.xlu0 %531
        %534 = vset.pattern.permute.xlu0 1
        %535 = vperm.xlu0 %534, %v274
        %v536 = vpop.permute.xlu0 %535
        %538 = vset.pattern.permute.xlu0 1
        %539 = vperm.xlu0 %538, %v275
        %v540 = vpop.permute.xlu0 %539
        %542 = vset.pattern.permute.xlu0 1
        %543 = vperm.xlu0 %542, %v276
        %v544 = vpop.permute.xlu0 %543
        %546 = vset.pattern.permute.xlu0 1
        %547 = vperm.xlu0 %546, %v277
        %v548 = vpop.permute.xlu0 %547
        %550 = vset.pattern.permute.xlu0 1
        %551 = vperm.xlu0 %550, %v278
        %v552 = vpop.permute.xlu0 %551
        %554 = vset.pattern.permute.xlu0 1
        %555 = vperm.xlu0 %554, %v279
        %v556 = vpop.permute.xlu0 %555
        %558 = vset.pattern.permute.xlu0 1
        %559 = vperm.xlu0 %558, %v280
        %v560 = vpop.permute.xlu0 %559
        %562 = vset.pattern.permute.xlu0 1
        %563 = vperm.xlu0 %562, %v281
        %v564 = vpop.permute.xlu0 %563
        %566 = vset.pattern.permute.xlu0 1
        %567 = vperm.xlu0 %566, %v282
        %v568 = vpop.permute.xlu0 %567
        %570 = vset.pattern.permute.xlu0 1
        %571 = vperm.xlu0 %570, %v283
        %v572 = vpop.permute.xlu0 %571
        %574 = vset.pattern.permute.xlu0 1
        %575 = vperm.xlu0 %574, %v284
        %v576 = vpop.permute.xlu0 %575
        %578 = vset.pattern.permute.xlu0 1
        %579 = vperm.xlu0 %578, %v285
        %v580 = vpop.permute.xlu0 %579
        %582 = vset.pattern.permute.xlu0 1
        %583 = vperm.xlu0 %582, %v286
        %v584 = vpop.permute.xlu0 %583
        %586 = vset.pattern.permute.xlu0 1
        %587 = vperm.xlu0 %586, %v287
        %v588 = vpop.permute.xlu0 %587
        %590 = vset.pattern.permute.xlu0 1
        %591 = vperm.xlu0 %590, %v288
        %v592 = vpop.permute.xlu0 %591
        %594 = vset.pattern.permute.xlu0 1
        %595 = vperm.xlu0 %594, %v289
        %v596 = vpop.permute.xlu0 %595
        %598 = vset.pattern.permute.xlu0 1
        %599 = vperm.xlu0 %598, %v290
        %v600 = vpop.permute.xlu0 %599
        %602 = vset.pattern.permute.xlu0 1
        %603 = vperm.xlu0 %602, %v291
        %v604 = vpop.permute.xlu0 %603
        %606 = vset.pattern.permute.xlu0 1
        %607 = vperm.xlu0 %606, %v292
        %v608 = vpop.permute.xlu0 %607
        %610 = vset.pattern.permute.xlu0 1
        %611 = vperm.xlu0 %610, %v293
        %v612 = vpop.permute.xlu0 %611
        %614 = vset.pattern.permute.xlu0 1
        %615 = vperm.xlu0 %614, %v294
        %v616 = vpop.permute.xlu0 %615
        %v618 = vmul.f32 %v458, %v492
        %v619 = vmul.f32 %v459, %v496
        %v620 = vmul.f32 %v460, %v500
        %v621 = vmul.f32 %v461, %v504
        %v622 = vmul.f32 %v462, %v508
        %v623 = vmul.f32 %v463, %v512
        %v624 = vmul.f32 %v464, %v516
        %v625 = vmul.f32 %v465, %v520
        %v626 = vmul.f32 %v466, %v524
        %v627 = vmul.f32 %v467, %v528
        %v628 = vmul.f32 %v468, %v532
        %v629 = vmul.f32 %v469, %v536
        %v630 = vmul.f32 %v470, %v540
        %v631 = vmul.f32 %v471, %v544
        %v632 = vmul.f32 %v472, %v548
        %v633 = vmul.f32 %v473, %v552
        %v634 = vmul.f32 %v474, %v556
        %v635 = vmul.f32 %v475, %v560
        %v636 = vmul.f32 %v476, %v564
        %v637 = vmul.f32 %v477, %v568
        %v638 = vmul.f32 %v478, %v572
        %v639 = vmul.f32 %v479, %v576
        %v640 = vmul.f32 %v480, %v580
        %v641 = vmul.f32 %v481, %v584
        %v642 = vmul.f32 %v482, %v588
        %v643 = vmul.f32 %v483, %v592
        %v644 = vmul.f32 %v484, %v596
        %v645 = vmul.f32 %v485, %v600
        %v646 = vmul.f32 %v486, %v604
        %v647 = vmul.f32 %v487, %v608
        %v648 = vmul.f32 %v488, %v612
        %v649 = vmul.f32 %v489, %v616
        %vm650 = vcmask 130048
        %v652 = vsel %vm650, %v618, 0
        %v655 = vsel %vm650, %v619, 0
        %v658 = vsel %vm650, %v620, 0
        %v661 = vsel %vm650, %v621, 0
        %v664 = vsel %vm650, %v622, 0
        %v667 = vsel %vm650, %v623, 0
        %v670 = vsel %vm650, %v624, 0
        %v673 = vsel %vm650, %v625, 0
        %v676 = vsel %vm650, %v626, 0
        %v679 = vsel %vm650, %v627, 0
        %v682 = vsel %vm650, %v628, 0
        %v685 = vsel %vm650, %v629, 0
        %v688 = vsel %vm650, %v630, 0
        %v691 = vsel %vm650, %v631, 0
        %v694 = vsel %vm650, %v632, 0
        %v697 = vsel %vm650, %v633, 0
        %v700 = vsel %vm650, %v634, 0
        %v703 = vsel %vm650, %v635, 0
        %v706 = vsel %vm650, %v636, 0
        %v709 = vsel %vm650, %v637, 0
        %v712 = vsel %vm650, %v638, 0
        %v715 = vsel %vm650, %v639, 0
        %v718 = vsel %vm650, %v640, 0
        %v721 = vsel %vm650, %v641, 0
        %v724 = vsel %vm650, %v642, 0
        %v727 = vsel %vm650, %v643, 0
        %v730 = vsel %vm650, %v644, 0
        %v733 = vsel %vm650, %v645, 0
        %v736 = vsel %vm650, %v646, 0
        %v739 = vsel %vm650, %v647, 0
        %v742 = vsel %vm650, %v648, 0
        %v745 = vsel %vm650, %v649, 0
        %747 = vmatpush.msra.mxu0 0.0
        %748 = vmatpush.msra.mxu0 0.0
        %749 = vmatpush.msra.mxu0 0.0
        %750 = vmatpush.msra.mxu0 0.0
        %751 = vmatpush.msra.mxu0 0.0
        %752 = vmatpush.msra.mxu0 0.0
        %753 = vmatpush.msra.mxu0 0.0
        %754 = vmatpush.msra.mxu0 0.0
        %755 = vmatpush.msra.mxu0 0.0
        %756 = vmatpush.msra.mxu0 0.0
        %757 = vmatpush.msra.mxu0 0.0
        %758 = vmatpush.msra.mxu0 0.0
        %759 = vmatpush.msra.mxu0 0.0
        %760 = vmatpush.msra.mxu0 0.0
        %761 = vmatpush.msra.mxu0 %v262
        %762 = vmatpush.msra.mxu0 %v261
        %763 = vmatmul.f32.gmra.mxu0 %v652
        %v764 = vpop.f32.mrf.mxu0
        %v765 = vadd.f32 0.0, %v764
        %766 = vmatmul.f32.gmra.mxu0 %v655
        %v767 = vpop.f32.mrf.mxu0
        %v768 = vadd.f32 0.0, %v767
        %769 = vmatmul.f32.gmra.mxu0 %v658
        %v770 = vpop.f32.mrf.mxu0
        %v771 = vadd.f32 0.0, %v770
        %772 = vmatmul.f32.gmra.mxu0 %v661
        %v773 = vpop.f32.mrf.mxu0
        %v774 = vadd.f32 0.0, %v773
        %775 = vmatmul.f32.gmra.mxu0 %v664
        %v776 = vpop.f32.mrf.mxu0
        %v777 = vadd.f32 0.0, %v776
        %778 = vmatmul.f32.gmra.mxu0 %v667
        %v779 = vpop.f32.mrf.mxu0
        %v780 = vadd.f32 0.0, %v779
        %781 = vmatmul.f32.gmra.mxu0 %v670
        %v782 = vpop.f32.mrf.mxu0
        %v783 = vadd.f32 0.0, %v782
        %784 = vmatmul.f32.gmra.mxu0 %v673
        %v785 = vpop.f32.mrf.mxu0
        %v786 = vadd.f32 0.0, %v785
        %787 = vmatmul.f32.gmra.mxu0 %v676
        %v788 = vpop.f32.mrf.mxu0
        %v789 = vadd.f32 0.0, %v788
        %790 = vmatmul.f32.gmra.mxu0 %v679
        %v791 = vpop.f32.mrf.mxu0
        %v792 = vadd.f32 0.0, %v791
        %793 = vmatmul.f32.gmra.mxu0 %v682
        %v794 = vpop.f32.mrf.mxu0
        %v795 = vadd.f32 0.0, %v794
        %796 = vmatmul.f32.gmra.mxu0 %v685
        %v797 = vpop.f32.mrf.mxu0
        %v798 = vadd.f32 0.0, %v797
        %799 = vmatmul.f32.gmra.mxu0 %v688
        %v800 = vpop.f32.mrf.mxu0
        %v801 = vadd.f32 0.0, %v800
        %802 = vmatmul.f32.gmra.mxu0 %v691
        %v803 = vpop.f32.mrf.mxu0
        %v804 = vadd.f32 0.0, %v803
        %805 = vmatmul.f32.gmra.mxu0 %v694
        %v806 = vpop.f32.mrf.mxu0
        %v807 = vadd.f32 0.0, %v806
        %808 = vmatmul.f32.gmra.mxu0 %v697
        %v809 = vpop.f32.mrf.mxu0
        %v810 = vadd.f32 0.0, %v809
        %811 = vmatmul.f32.gmra.mxu0 %v700
        %v812 = vpop.f32.mrf.mxu0
        %v813 = vadd.f32 0.0, %v812
        %814 = vmatmul.f32.gmra.mxu0 %v703
        %v815 = vpop.f32.mrf.mxu0
        %v816 = vadd.f32 0.0, %v815
        %817 = vmatmul.f32.gmra.mxu0 %v706
        %v818 = vpop.f32.mrf.mxu0
        %v819 = vadd.f32 0.0, %v818
        %820 = vmatmul.f32.gmra.mxu0 %v709
        %v821 = vpop.f32.mrf.mxu0
        %v822 = vadd.f32 0.0, %v821
        %823 = vmatmul.f32.gmra.mxu0 %v712
        %v824 = vpop.f32.mrf.mxu0
        %v825 = vadd.f32 0.0, %v824
        %826 = vmatmul.f32.gmra.mxu0 %v715
        %v827 = vpop.f32.mrf.mxu0
        %v828 = vadd.f32 0.0, %v827
        %829 = vmatmul.f32.gmra.mxu0 %v718
        %v830 = vpop.f32.mrf.mxu0
        %v831 = vadd.f32 0.0, %v830
        %832 = vmatmul.f32.gmra.mxu0 %v721
        %v833 = vpop.f32.mrf.mxu0
        %v834 = vadd.f32 0.0, %v833
        %835 = vmatmul.f32.gmra.mxu0 %v724
        %v836 = vpop.f32.mrf.mxu0
        %v837 = vadd.f32 0.0, %v836
        %838 = vmatmul.f32.gmra.mxu0 %v727
        %v839 = vpop.f32.mrf.mxu0
        %v840 = vadd.f32 0.0, %v839
        %841 = vmatmul.f32.gmra.mxu0 %v730
        %v842 = vpop.f32.mrf.mxu0
        %v843 = vadd.f32 0.0, %v842
        %844 = vmatmul.f32.gmra.mxu0 %v733
        %v845 = vpop.f32.mrf.mxu0
        %v846 = vadd.f32 0.0, %v845
        %847 = vmatmul.f32.gmra.mxu0 %v736
        %v848 = vpop.f32.mrf.mxu0
        %v849 = vadd.f32 0.0, %v848
        %850 = vmatmul.f32.gmra.mxu0 %v739
        %v851 = vpop.f32.mrf.mxu0
        %v852 = vadd.f32 0.0, %v851
        %853 = vmatmul.f32.gmra.mxu0 %v742
        %v854 = vpop.f32.mrf.mxu0
        %v855 = vadd.f32 0.0, %v854
        %856 = vmatmul.f32.gmra.mxu0 %v745
        %v857 = vpop.f32.mrf.mxu0
        %v858 = vadd.f32 0.0, %v857
        %859 = vdwg.mxu0
        %v860 = vlaneseq
        %v861 = vshrl.u32 %v860, 7
        %v862 = vadd.s32 %v861, 8
        %v863 = vperm.slane %v295, 0
        %v864 = vperm.slane %v295, 1
        %vm865 = vcmp.eq.s32.totalorder %v863, %v861
        %vm866 = vcmp.eq.s32.totalorder %v864, %v861
        %vm867 = vcmp.eq.s32.totalorder %v863, %v862
        %vm868 = vcmp.eq.s32.totalorder %v864, %v862
        %v869 = vsel %vm865, 1, 0
        %v870 = vsel %vm866, 1, 0
        %v871 = vsel %vm867, 1, 0
        %v872 = vsel %vm868, 1, 0
        %v873 = vcvt.s32.f32 %v869
        %v874 = vcvt.s32.f32 %v870
        %v875 = vcvt.s32.f32 %v871
        %v876 = vcvt.s32.f32 %v872
        %v877 = vld [vmem:[#allocation2] sm:$0xff]
        %v878 = vld [vmem:[#allocation2 + $0x20] sm:$0xff]
        %879 = vmatpush.msra.mxu0 %v810
        %880 = vmatpush.msra.mxu0 %v807
        %881 = vmatpush.msra.mxu0 %v804
        %882 = vmatpush.msra.mxu0 %v801
        %883 = vmatpush.msra.mxu0 %v798
        %884 = vmatpush.msra.mxu0 %v795
        %885 = vmatpush.msra.mxu0 %v792
        %886 = vmatpush.msra.mxu0 %v789
        %887 = vmatpush.msra.mxu0 %v786
        %888 = vmatpush.msra.mxu0 %v783
        %889 = vmatpush.msra.mxu0 %v780
        %890 = vmatpush.msra.mxu0 %v777
        %891 = vmatpush.msra.mxu0 %v774
        %892 = vmatpush.msra.mxu0 %v771
        %893 = vmatpush.msra.mxu0 %v768
        %894 = vmatpush.msra.mxu0 %v765
        %895 = vmatmul.f32.gmra.mxu0 %v873
        %v896 = vpop.f32.mrf.mxu0
        %v897 = vadd.f32 0.0, %v896
        %898 = vmatmul.f32.gmra.mxu0 %v875
        %v899 = vpop.f32.mrf.mxu0
        %v900 = vadd.f32 0.0, %v899
        %901 = vdwg.mxu0
        %902 = vmatpush.msra.mxu0 %v858
        %903 = vmatpush.msra.mxu0 %v855
        %904 = vmatpush.msra.mxu0 %v852
        %905 = vmatpush.msra.mxu0 %v849
        %906 = vmatpush.msra.mxu0 %v846
        %907 = vmatpush.msra.mxu0 %v843
        %908 = vmatpush.msra.mxu0 %v840
        %909 = vmatpush.msra.mxu0 %v837
        %910 = vmatpush.msra.mxu0 %v834
        %911 = vmatpush.msra.mxu0 %v831
        %912 = vmatpush.msra.mxu0 %v828
        %913 = vmatpush.msra.mxu0 %v825
        %914 = vmatpush.msra.mxu0 %v822
        %915 = vmatpush.msra.mxu0 %v819
        %916 = vmatpush.msra.mxu0 %v816
        %917 = vmatpush.msra.mxu0 %v813
        %918 = vmatmul.f32.gmra.mxu0 %v874
        %v919 = vpop.f32.mrf.mxu0
        %v920 = vadd.f32 %v897, %v919
        %921 = vmatmul.f32.gmra.mxu0 %v876
        %v922 = vpop.f32.mrf.mxu0
        %v923 = vadd.f32 %v900, %v922
        %924 = vdwg.mxu0
        %v925 = vadd.f32 %v877, %v920
        %v926 = vadd.f32 %v878, %v923
        %927 = vst [vmem:[#allocation2] sm:$0xff] %v925
        %928 = vst [vmem:[#allocation2 + $0x20] sm:$0xff] %v926
        %v929 = vadd.s32 %v861, 16
        %v930 = vadd.s32 %v862, 16
        %vm931 = vcmp.eq.s32.totalorder %v863, %v929
        %vm932 = vcmp.eq.s32.totalorder %v864, %v929
        %vm933 = vcmp.eq.s32.totalorder %v863, %v930
        %vm934 = vcmp.eq.s32.totalorder %v864, %v930
        %v935 = vsel %vm931, 1, 0
        %v936 = vsel %vm932, 1, 0
        %v937 = vsel %vm933, 1, 0
        %v938 = vsel %vm934, 1, 0
        %v939 = vcvt.s32.f32 %v935
        %v940 = vcvt.s32.f32 %v936
        %v941 = vcvt.s32.f32 %v937
        %v942 = vcvt.s32.f32 %v938
        %v943 = vld [vmem:[#allocation2 + $0x8] sm:$0xff]
        %v944 = vld [vmem:[#allocation2 + $0x28] sm:$0xff]
        %945 = vmatpush.msra.mxu0 %v810
        %946 = vmatpush.msra.mxu0 %v807
        %947 = vmatpush.msra.mxu0 %v804
        %948 = vmatpush.msra.mxu0 %v801
        %949 = vmatpush.msra.mxu0 %v798
        %950 = vmatpush.msra.mxu0 %v795
        %951 = vmatpush.msra.mxu0 %v792
        %952 = vmatpush.msra.mxu0 %v789
        %953 = vmatpush.msra.mxu0 %v786
        %954 = vmatpush.msra.mxu0 %v783
        %955 = vmatpush.msra.mxu0 %v780
        %956 = vmatpush.msra.mxu0 %v777
        %957 = vmatpush.msra.mxu0 %v774
        %958 = vmatpush.msra.mxu0 %v771
        %959 = vmatpush.msra.mxu0 %v768
        %960 = vmatpush.msra.mxu0 %v765
        %961 = vmatmul.f32.gmra.mxu0 %v939
        %v962 = vpop.f32.mrf.mxu0
        %v963 = vadd.f32 0.0, %v962
        %964 = vmatmul.f32.gmra.mxu0 %v941
        %v965 = vpop.f32.mrf.mxu0
        %v966 = vadd.f32 0.0, %v965
        %967 = vdwg.mxu0
        %968 = vmatpush.msra.mxu0 %v858
        %969 = vmatpush.msra.mxu0 %v855
        %970 = vmatpush.msra.mxu0 %v852
        %971 = vmatpush.msra.mxu0 %v849
        %972 = vmatpush.msra.mxu0 %v846
        %973 = vmatpush.msra.mxu0 %v843
        %974 = vmatpush.msra.mxu0 %v840
        %975 = vmatpush.msra.mxu0 %v837
        %976 = vmatpush.msra.mxu0 %v834
        %977 = vmatpush.msra.mxu0 %v831
        %978 = vmatpush.msra.mxu0 %v828
        %979 = vmatpush.msra.mxu0 %v825
        %980 = vmatpush.msra.mxu0 %v822
        %981 = vmatpush.msra.mxu0 %v819
        %982 = vmatpush.msra.mxu0 %v816
        %983 = vmatpush.msra.mxu0 %v813
        %984 = vmatmul.f32.gmra.mxu0 %v940
        %v985 = vpop.f32.mrf.mxu0
        %v986 = vadd.f32 %v963, %v985
        %987 = vmatmul.f32.gmra.mxu0 %v942
        %v988 = vpop.f32.mrf.mxu0
        %v989 = vadd.f32 %v966, %v988
        %990 = vdwg.mxu0
        %v991 = vadd.f32 %v943, %v986
        %v992 = vadd.f32 %v944, %v989
        %993 = vst [vmem:[#allocation2 + $0x8] sm:$0xff] %v991
        %994 = vst [vmem:[#allocation2 + $0x28] sm:$0xff] %v992
        %v995 = vadd.s32 %v861, 32
        %v996 = vadd.s32 %v862, 32
        %vm997 = vcmp.eq.s32.totalorder %v863, %v995
        %vm998 = vcmp.eq.s32.totalorder %v864, %v995
        %vm999 = vcmp.eq.s32.totalorder %v863, %v996
        %vm1000 = vcmp.eq.s32.totalorder %v864, %v996
        %v1001 = vsel %vm997, 1, 0
        %v1002 = vsel %vm998, 1, 0
        %v1003 = vsel %vm999, 1, 0
        %v1004 = vsel %vm1000, 1, 0
        %v1005 = vcvt.s32.f32 %v1001
        %v1006 = vcvt.s32.f32 %v1002
        %v1007 = vcvt.s32.f32 %v1003
        %v1008 = vcvt.s32.f32 %v1004
        %v1009 = vld [vmem:[#allocation2 + $0x10] sm:$0xff]
        %v1010 = vld [vmem:[#allocation2 + $0x30] sm:$0xff]
        %1011 = vmatpush.msra.mxu0 %v810
        %1012 = vmatpush.msra.mxu0 %v807
        %1013 = vmatpush.msra.mxu0 %v804
        %1014 = vmatpush.msra.mxu0 %v801
        %1015 = vmatpush.msra.mxu0 %v798
        %1016 = vmatpush.msra.mxu0 %v795
        %1017 = vmatpush.msra.mxu0 %v792
        %1018 = vmatpush.msra.mxu0 %v789
        %1019 = vmatpush.msra.mxu0 %v786
        %1020 = vmatpush.msra.mxu0 %v783
        %1021 = vmatpush.msra.mxu0 %v780
        %1022 = vmatpush.msra.mxu0 %v777
        %1023 = vmatpush.msra.mxu0 %v774
        %1024 = vmatpush.msra.mxu0 %v771
        %1025 = vmatpush.msra.mxu0 %v768
        %1026 = vmatpush.msra.mxu0 %v765
        %1027 = vmatmul.f32.gmra.mxu0 %v1005
        %v1028 = vpop.f32.mrf.mxu0
        %v1029 = vadd.f32 0.0, %v1028
        %1030 = vmatmul.f32.gmra.mxu0 %v1007
        %v1031 = vpop.f32.mrf.mxu0
        %v1032 = vadd.f32 0.0, %v1031
        %1033 = vdwg.mxu0
        %1034 = vmatpush.msra.mxu0 %v858
        %1035 = vmatpush.msra.mxu0 %v855
        %1036 = vmatpush.msra.mxu0 %v852
        %1037 = vmatpush.msra.mxu0 %v849
        %1038 = vmatpush.msra.mxu0 %v846
        %1039 = vmatpush.msra.mxu0 %v843
        %1040 = vmatpush.msra.mxu0 %v840
        %1041 = vmatpush.msra.mxu0 %v837
        %1042 = vmatpush.msra.mxu0 %v834
        %1043 = vmatpush.msra.mxu0 %v831
        %1044 = vmatpush.msra.mxu0 %v828
        %1045 = vmatpush.msra.mxu0 %v825
        %1046 = vmatpush.msra.mxu0 %v822
        %1047 = vmatpush.msra.mxu0 %v819
        %1048 = vmatpush.msra.mxu0 %v816
        %1049 = vmatpush.msra.mxu0 %v813
        %1050 = vmatmul.f32.gmra.mxu0 %v1006
        %v1051 = vpop.f32.mrf.mxu0
        %v1052 = vadd.f32 %v1029, %v1051
        %1053 = vmatmul.f32.gmra.mxu0 %v1008
        %v1054 = vpop.f32.mrf.mxu0
        %v1055 = vadd.f32 %v1032, %v1054
        %1056 = vdwg.mxu0
        %v1057 = vadd.f32 %v1009, %v1052
        %v1058 = vadd.f32 %v1010, %v1055
        %1059 = vst [vmem:[#allocation2 + $0x10] sm:$0xff] %v1057
        %1060 = vst [vmem:[#allocation2 + $0x30] sm:$0xff] %v1058
        %v1061 = vadd.s32 %v861, 48
        %v1062 = vadd.s32 %v862, 48
        %vm1063 = vcmp.eq.s32.totalorder %v863, %v1061
        %vm1064 = vcmp.eq.s32.totalorder %v864, %v1061
        %vm1065 = vcmp.eq.s32.totalorder %v863, %v1062
        %vm1066 = vcmp.eq.s32.totalorder %v864, %v1062
        %v1067 = vsel %vm1063, 1, 0
        %v1068 = vsel %vm1064, 1, 0
        %v1069 = vsel %vm1065, 1, 0
        %v1070 = vsel %vm1066, 1, 0
        %v1071 = vcvt.s32.f32 %v1067
        %v1072 = vcvt.s32.f32 %v1068
        %v1073 = vcvt.s32.f32 %v1069
        %v1074 = vcvt.s32.f32 %v1070
        %v1075 = vld [vmem:[#allocation2 + $0x18] sm:$0xff]
        %v1076 = vld [vmem:[#allocation2 + $0x38] sm:$0xff]
        %1077 = vmatpush.msra.mxu0 %v810
        %1078 = vmatpush.msra.mxu0 %v807
        %1079 = vmatpush.msra.mxu0 %v804
        %1080 = vmatpush.msra.mxu0 %v801
        %1081 = vmatpush.msra.mxu0 %v798
        %1082 = vmatpush.msra.mxu0 %v795
        %1083 = vmatpush.msra.mxu0 %v792
        %1084 = vmatpush.msra.mxu0 %v789
        %1085 = vmatpush.msra.mxu0 %v786
        %1086 = vmatpush.msra.mxu0 %v783
        %1087 = vmatpush.msra.mxu0 %v780
        %1088 = vmatpush.msra.mxu0 %v777
        %1089 = vmatpush.msra.mxu0 %v774
        %1090 = vmatpush.msra.mxu0 %v771
        %1091 = vmatpush.msra.mxu0 %v768
        %1092 = vmatpush.msra.mxu0 %v765
        %1093 = vmatmul.f32.gmra.mxu0 %v1071
        %v1094 = vpop.f32.mrf.mxu0
        %v1095 = vadd.f32 0.0, %v1094
        %1096 = vmatmul.f32.gmra.mxu0 %v1073
        %v1097 = vpop.f32.mrf.mxu0
        %v1098 = vadd.f32 0.0, %v1097
        %1099 = vdwg.mxu0
        %1100 = vmatpush.msra.mxu0 %v858
        %1101 = vmatpush.msra.mxu0 %v855
        %1102 = vmatpush.msra.mxu0 %v852
        %1103 = vmatpush.msra.mxu0 %v849
        %1104 = vmatpush.msra.mxu0 %v846
        %1105 = vmatpush.msra.mxu0 %v843
        %1106 = vmatpush.msra.mxu0 %v840
        %1107 = vmatpush.msra.mxu0 %v837
        %1108 = vmatpush.msra.mxu0 %v834
        %1109 = vmatpush.msra.mxu0 %v831
        %1110 = vmatpush.msra.mxu0 %v828
        %1111 = vmatpush.msra.mxu0 %v825
        %1112 = vmatpush.msra.mxu0 %v822
        %1113 = vmatpush.msra.mxu0 %v819
        %1114 = vmatpush.msra.mxu0 %v816
        %1115 = vmatpush.msra.mxu0 %v813
        %1116 = vmatmul.f32.gmra.mxu0 %v1072
        %v1117 = vpop.f32.mrf.mxu0
        %v1118 = vadd.f32 %v1095, %v1117
        %1119 = vmatmul.f32.gmra.mxu0 %v1074
        %v1120 = vpop.f32.mrf.mxu0
        %v1121 = vadd.f32 %v1098, %v1120
        %1122 = vdwg.mxu0
        %v1123 = vadd.f32 %v1075, %v1118
        %v1124 = vadd.f32 %v1076, %v1121
        %1125 = vst [vmem:[#allocation2 + $0x18] sm:$0xff] %v1123
        %1126 = vst [vmem:[#allocation2 + $0x38] sm:$0xff] %v1124
        %p1127 = scmp.eq.s32.totalorder %s18, 1
        // Predicated region
        $region49: #{tpu_custom_call.1} parent=39 // pred_check
          %p1128 = pneg %p1127
        $region50: #{tpu_custom_call.1} parent=39 // pred_check_branch
          %1130 = sbr.rel (%p1128) target = $region52
        $region51: #{tpu_custom_call.1} parent=39 // pred_region
          %v1131 = vld [vmem:[#allocation2] sm:$0xff]
          %v1132 = vld [vmem:[#allocation2 + $0x8] sm:$0xff]
          %v1133 = vld [vmem:[#allocation2 + $0x10] sm:$0xff]
          %v1134 = vld [vmem:[#allocation2 + $0x18] sm:$0xff]
          %v1135 = vld [vmem:[#allocation2 + $0x20] sm:$0xff]
          %v1136 = vld [vmem:[#allocation2 + $0x28] sm:$0xff]
          %v1137 = vld [vmem:[#allocation2 + $0x30] sm:$0xff]
          %v1138 = vld [vmem:[#allocation2 + $0x38] sm:$0xff]
          %v1139 = vld [vmem:[%s3] sm:$0xff]
          %v1140 = vld [vmem:[%s3 + $0x8] sm:$0xff]
          %v1141 = vld [vmem:[%s3 + $0x10] sm:$0xff]
          %v1142 = vld [vmem:[%s3 + $0x18] sm:$0xff]
          %v1143 = vld [vmem:[%s3 + $0x20] sm:$0xff]
          %v1144 = vld [vmem:[%s3 + $0x28] sm:$0xff]
          %v1145 = vld [vmem:[%s3 + $0x30] sm:$0xff]
          %v1146 = vld [vmem:[%s3 + $0x38] sm:$0xff]
          %v1147 = vld [vmem:[%s3 + $0x40] sm:$0xff]
          %v1148 = vld [vmem:[%s3 + $0x48] sm:$0xff]
          %v1149 = vld [vmem:[%s3 + $0x50] sm:$0xff]
          %v1150 = vld [vmem:[%s3 + $0x58] sm:$0xff]
          %v1151 = vld [vmem:[%s3 + $0x60] sm:$0xff]
          %v1152 = vld [vmem:[%s3 + $0x68] sm:$0xff]
          %v1153 = vld [vmem:[%s3 + $0x70] sm:$0xff]
          %v1154 = vld [vmem:[%s3 + $0x78] sm:$0xff]
          %v1155 = vld [vmem:[%s3 + $0x80] sm:$0xff]
          %v1156 = vld [vmem:[%s3 + $0x88] sm:$0xff]
          %v1157 = vld [vmem:[%s3 + $0x90] sm:$0xff]
          %v1158 = vld [vmem:[%s3 + $0x98] sm:$0xff]
          %v1159 = vld [vmem:[%s3 + $0xa0] sm:$0xff]
          %v1160 = vld [vmem:[%s3 + $0xa8] sm:$0xff]
          %v1161 = vld [vmem:[%s3 + $0xb0] sm:$0xff]
          %v1162 = vld [vmem:[%s3 + $0xb8] sm:$0xff]
          %v1163 = vld [vmem:[%s3 + $0xc0] sm:$0xff]
          %v1164 = vld [vmem:[%s3 + $0xc8] sm:$0xff]
          %v1165 = vld [vmem:[%s3 + $0xd0] sm:$0xff]
          %v1166 = vld [vmem:[%s3 + $0xd8] sm:$0xff]
          %v1167 = vld [vmem:[%s3 + $0xe0] sm:$0xff]
          %v1168 = vld [vmem:[%s3 + $0xe8] sm:$0xff]
          %v1169 = vld [vmem:[%s3 + $0xf0] sm:$0xff]
          %v1170 = vld [vmem:[%s3 + $0xf8] sm:$0xff]
          %v1171 = vld [vmem:[%s3 + $0x100] sm:$0xff]
          %v1172 = vld [vmem:[%s3 + $0x108] sm:$0xff]
          %v1173 = vld [vmem:[%s3 + $0x110] sm:$0xff]
          %v1174 = vld [vmem:[%s3 + $0x118] sm:$0xff]
          %v1175 = vld [vmem:[%s3 + $0x120] sm:$0xff]
          %v1176 = vld [vmem:[%s3 + $0x128] sm:$0xff]
          %v1177 = vld [vmem:[%s3 + $0x130] sm:$0xff]
          %v1178 = vld [vmem:[%s3 + $0x138] sm:$0xff]
          %v1179 = vld [vmem:[%s3 + $0x140] sm:$0xff]
          %v1180 = vld [vmem:[%s3 + $0x148] sm:$0xff]
          %v1181 = vld [vmem:[%s3 + $0x150] sm:$0xff]
          %v1182 = vld [vmem:[%s3 + $0x158] sm:$0xff]
          %v1183 = vld [vmem:[%s3 + $0x160] sm:$0xff]
          %v1184 = vld [vmem:[%s3 + $0x168] sm:$0xff]
          %v1185 = vld [vmem:[%s3 + $0x170] sm:$0xff]
          %v1186 = vld [vmem:[%s3 + $0x178] sm:$0xff]
          %v1187 = vld [vmem:[%s3 + $0x180] sm:$0xff]
          %v1188 = vld [vmem:[%s3 + $0x188] sm:$0xff]
          %v1189 = vld [vmem:[%s3 + $0x190] sm:$0xff]
          %v1190 = vld [vmem:[%s3 + $0x198] sm:$0xff]
          %v1191 = vld [vmem:[%s3 + $0x1a0] sm:$0xff]
          %v1192 = vld [vmem:[%s3 + $0x1a8] sm:$0xff]
          %v1193 = vld [vmem:[%s3 + $0x1b0] sm:$0xff]
          %v1194 = vld [vmem:[%s3 + $0x1b8] sm:$0xff]
          %v1195 = vld [vmem:[%s3 + $0x1c0] sm:$0xff]
          %v1196 = vld [vmem:[%s3 + $0x1c8] sm:$0xff]
          %v1197 = vld [vmem:[%s3 + $0x1d0] sm:$0xff]
          %v1198 = vld [vmem:[%s3 + $0x1d8] sm:$0xff]
          %v1199 = vld [vmem:[%s3 + $0x1e0] sm:$0xff]
          %v1200 = vld [vmem:[%s3 + $0x1e8] sm:$0xff]
          %v1201 = vld [vmem:[%s3 + $0x1f0] sm:$0xff]
          %v1202 = vld [vmem:[%s3 + $0x1f8] sm:$0xff]
          %v1203 = vld [vmem:[%s4] sm:$0x1]
          %v1205 = vperm.slane %v1203, 0
          %1207 = vmatpush.msra.mxu0 %v1154
          %1208 = vmatpush.msra.mxu0 %v1153
          %1209 = vmatpush.msra.mxu0 %v1152
          %1210 = vmatpush.msra.mxu0 %v1151
          %1211 = vmatpush.msra.mxu0 %v1150
          %1212 = vmatpush.msra.mxu0 %v1149
          %1213 = vmatpush.msra.mxu0 %v1148
          %1214 = vmatpush.msra.mxu0 %v1147
          %1215 = vmatpush.msra.mxu0 %v1146
          %1216 = vmatpush.msra.mxu0 %v1145
          %1217 = vmatpush.msra.mxu0 %v1144
          %1218 = vmatpush.msra.mxu0 %v1143
          %1219 = vmatpush.msra.mxu0 %v1142
          %1220 = vmatpush.msra.mxu0 %v1141
          %1221 = vmatpush.msra.mxu0 %v1140
          %1222 = vmatpush.msra.mxu0 %v1139
          %1223 = vmatmul.f32.gmra.mxu0 %v1131
          %v1224 = vpop.f32.mrf.mxu0
          %v1225 = vadd.f32 %v1205, %v1224
          %1226 = vmatmul.f32.gmra.mxu0 %v1135
          %v1227 = vpop.f32.mrf.mxu0
          %v1228 = vadd.f32 %v1205, %v1227
          %1229 = vdwg.mxu0
          %1230 = vmatpush.msra.mxu0 %v1170
          %1231 = vmatpush.msra.mxu0 %v1169
          %1232 = vmatpush.msra.mxu0 %v1168
          %1233 = vmatpush.msra.mxu0 %v1167
          %1234 = vmatpush.msra.mxu0 %v1166
          %1235 = vmatpush.msra.mxu0 %v1165
          %1236 = vmatpush.msra.mxu0 %v1164
          %1237 = vmatpush.msra.mxu0 %v1163
          %1238 = vmatpush.msra.mxu0 %v1162
          %1239 = vmatpush.msra.mxu0 %v1161
          %1240 = vmatpush.msra.mxu0 %v1160
          %1241 = vmatpush.msra.mxu0 %v1159
          %1242 = vmatpush.msra.mxu0 %v1158
          %1243 = vmatpush.msra.mxu0 %v1157
          %1244 = vmatpush.msra.mxu0 %v1156
          %1245 = vmatpush.msra.mxu0 %v1155
          %1246 = vmatmul.f32.gmra.mxu0 %v1132
          %v1247 = vpop.f32.mrf.mxu0
          %v1248 = vadd.f32 %v1225, %v1247
          %1249 = vmatmul.f32.gmra.mxu0 %v1136
          %v1250 = vpop.f32.mrf.mxu0
          %v1251 = vadd.f32 %v1228, %v1250
          %1252 = vdwg.mxu0
          %1253 = vmatpush.msra.mxu0 %v1186
          %1254 = vmatpush.msra.mxu0 %v1185
          %1255 = vmatpush.msra.mxu0 %v1184
          %1256 = vmatpush.msra.mxu0 %v1183
          %1257 = vmatpush.msra.mxu0 %v1182
          %1258 = vmatpush.msra.mxu0 %v1181
          %1259 = vmatpush.msra.mxu0 %v1180
          %1260 = vmatpush.msra.mxu0 %v1179
          %1261 = vmatpush.msra.mxu0 %v1178
          %1262 = vmatpush.msra.mxu0 %v1177
          %1263 = vmatpush.msra.mxu0 %v1176
          %1264 = vmatpush.msra.mxu0 %v1175
          %1265 = vmatpush.msra.mxu0 %v1174
          %1266 = vmatpush.msra.mxu0 %v1173
          %1267 = vmatpush.msra.mxu0 %v1172
          %1268 = vmatpush.msra.mxu0 %v1171
          %1269 = vmatmul.f32.gmra.mxu0 %v1133
          %v1270 = vpop.f32.mrf.mxu0
          %v1271 = vadd.f32 %v1248, %v1270
          %1272 = vmatmul.f32.gmra.mxu0 %v1137
          %v1273 = vpop.f32.mrf.mxu0
          %v1274 = vadd.f32 %v1251, %v1273
          %1275 = vdwg.mxu0
          %1276 = vmatpush.msra.mxu0 %v1202
          %1277 = vmatpush.msra.mxu0 %v1201
          %1278 = vmatpush.msra.mxu0 %v1200
          %1279 = vmatpush.msra.mxu0 %v1199
          %1280 = vmatpush.msra.mxu0 %v1198
          %1281 = vmatpush.msra.mxu0 %v1197
          %1282 = vmatpush.msra.mxu0 %v1196
          %1283 = vmatpush.msra.mxu0 %v1195
          %1284 = vmatpush.msra.mxu0 %v1194
          %1285 = vmatpush.msra.mxu0 %v1193
          %1286 = vmatpush.msra.mxu0 %v1192
          %1287 = vmatpush.msra.mxu0 %v1191
          %1288 = vmatpush.msra.mxu0 %v1190
          %1289 = vmatpush.msra.mxu0 %v1189
          %1290 = vmatpush.msra.mxu0 %v1188
          %1291 = vmatpush.msra.mxu0 %v1187
          %1292 = vmatmul.f32.gmra.mxu0 %v1134
          %v1293 = vpop.f32.mrf.mxu0
          %v1294 = vadd.f32 %v1271, %v1293
          %1295 = vmatmul.f32.gmra.mxu0 %v1138
          %v1296 = vpop.f32.mrf.mxu0
          %v1297 = vadd.f32 %v1274, %v1296
          %1298 = vdwg.mxu0
          %v1299 = vmax.f32 %v1294, 0.0
          %v1300 = vmax.f32 %v1297, 0.0
          %1301 = vst [vmem:[#allocation6] sm:$0xff] %v1299
          %1302 = vst [vmem:[#allocation6 + $0x8] sm:$0xff] %v1300
        $region52: #{tpu_custom_call.1} parent=39 // pred_fallthru
          _
        // Predicated region
        $region53: #{tpu_custom_call.1} parent=39 // pred_check
          %p1303 = pneg %p146
        $region54: #{tpu_custom_call.1} parent=39 // pred_check_branch
          %1305 = sbr.rel (%p1303) target = $region56
        $region55: #{tpu_custom_call.1} parent=39 // pred_region
          %1307 = vsyncadd [#allocation5], 0
          %s1308 = sshll.u32 [#allocation6], 4
          %s1309 = int_to_ptr.vmem [resolvable:$true] %s1308
          %s1310 = sshll.u32 %s5, 4
          %s1311 = int_to_ptr.hbm [resolvable:$true] %s1310
          %1316 = dma.vmem_to_hbm [thread:$0]  %s1309, 256, %s1311, [#allocation5], 128, 128, 8
        $region56: #{tpu_custom_call.1} parent=39 // pred_fallthru
          _
        // Predicated region
        $region57: #{tpu_custom_call.1} parent=39 // pred_check
          %p1317 = pneg %p146
        $region58: #{tpu_custom_call.1} parent=39 // pred_check_branch
          %1319 = sbr.rel (%p1317) target = $region60
        $region59: #{tpu_custom_call.1} parent=39 // pred_region
          %1321 = dma.done [#allocation5], 256
        $region60: #{tpu_custom_call.1} parent=39 // pred_fallthru
          _
      $region40: #{tpu_custom_call.1} parent=5 // pred_fallthru
        _
      %p1322 = scmp.le.s32.totalorder 2, %s13
      // Predicated region
      $region61: #{tpu_custom_call.1} parent=5 // pred_check
        %p1323 = pneg %p1322
      $region62: #{tpu_custom_call.1} parent=5 // pred_check_branch
        %1325 = sbr.rel (%p1323) target = $region64
      $region63: #{tpu_custom_call.1} parent=5 // pred_region
        %s1326 = ssub.s32 %s13, 2
      $region64: #{tpu_custom_call.1} parent=5 // pred_fallthru
        _
    $region6: #{tpu_custom_call.1} parent=1 // loop_footer
      %s17 = sadd.s32 1, %s13
    $region7: #{tpu_custom_call.1} parent=1 // loop_footer_branch
      %12 = sbr.rel target = $region3
    $region8: #{tpu_custom_call.1} parent=1 // loop_exit
      _
    %1327 = vsyncpa [#allocation4], 1
    %s1328 = scalar_lea.sflag [#allocation4], 1
    %1329 = vsyncpa %s1328, 1
    %1330 = vsyncpa [#allocation5], 1
    %s1331 = scalar_lea.sflag [#allocation5], 1
    %1332 = vsyncpa %s1331, 1

</llo_original>
